<compile_context>
chip_gen: v7x
topology: tpu7x:2x2x1
jax: 0.10.0
libtpu: 0.0.40
codegen_flags: <defaults>
</compile_context>

<pallas_src>
import jax
import jax.numpy as jnp
from jax.experimental import pallas as pl
from jax.experimental.pallas import tpu as pltpu


def shared_encoder_kernel(x_ref, w1_ref, b1_ref, g_ref, beta_ref, w2_ref, b2_ref, m_ref, o_ref):
    # MXU operand dtype follows the weights (supports bf16 weights); accumulate in f32.
    mxu_dtype = w1_ref.dtype

    x = x_ref[...]
    if x.dtype != mxu_dtype:
        x = x.astype(mxu_dtype)

    # shared_1: Linear(D, D) (block-diagonal when lane-folded), f32 accumulation on the MXU.
    h = jnp.dot(x, w1_ref[...], preferred_element_type=jnp.float32)
    h = h + b1_ref[...].astype(jnp.float32)
    # shared_1_activation: LeakyReLU(negative_slope=0.01) -> single vmax.
    h = jnp.maximum(h, 0.01 * h)

    # layer_norm: LayerNorm(D), eps=1e-5, elementwise affine.
    # Group mean/variance via a block-diagonal averaging matmul M (f32). For the lane-folded
    # layout this reduces each independent D-lane group; for fold=1, M = ones((D,D))/D.
    mean = jnp.dot(h, m_ref[...], preferred_element_type=jnp.float32)
    centered = h - mean
    var = jnp.dot(centered * centered, m_ref[...], preferred_element_type=jnp.float32)
    hn = centered * jax.lax.rsqrt(var + 1e-5)
    hn = hn * g_ref[...].astype(jnp.float32) + beta_ref[...].astype(jnp.float32)

    # shared_2: Linear(D, D).
    hn_in = hn if mxu_dtype == jnp.float32 else hn.astype(mxu_dtype)
    y = jnp.dot(hn_in, w2_ref[...], preferred_element_type=jnp.float32)
    y = y + b2_ref[...].astype(jnp.float32)
    # shared_2_activation: LeakyReLU(negative_slope=0.01).
    y = jnp.maximum(y, 0.01 * y)

    o_ref[...] = y.astype(o_ref.dtype)


def shared_encoder(x, w1, b1, gamma, beta, w2, b2, *, tb=None):
    """x: (B, D). Weights w1, w2: (D, D) in (in, out) layout (f32 or bf16).
    b1, b2, gamma, beta: (1, D)."""
    B, D = x.shape
    w_dtype = w1.dtype

    # ---- Lane-dense fold: pack `fold` batch rows into the 128-lane dim. -------------------
    fold = 128 // D if (D < 128 and 128 % D == 0) else 1
    Df = fold * D

    if fold > 1:
        eye_w = jnp.eye(fold, dtype=w_dtype)
        w1f = jnp.kron(eye_w, w1)                       # block-diagonal (Df, Df)
        w2f = jnp.kron(eye_w, w2)
        b1f = jnp.tile(b1, (1, fold))
        b2f = jnp.tile(b2, (1, fold))
        gf = jnp.tile(gamma, (1, fold))
        betaf = jnp.tile(beta, (1, fold))
        Bp = ((B + fold - 1) // fold) * fold
        x_in = x if Bp == B else jnp.pad(x, ((0, Bp - B), (0, 0)))
        x_in = x_in.reshape(Bp // fold, Df)             # lane-dense input slab
    else:
        w1f, w2f, b1f, b2f, gf, betaf = w1, w2, b1, b2, gamma, beta
        Bp = B
        x_in = x

    # Block-diagonal group-averaging matrix for the LayerNorm statistics (always f32).
    mmat = jnp.kron(jnp.eye(fold, dtype=jnp.float32),
                    jnp.full((D, D), 1.0 / D, dtype=jnp.float32))

    rows = Bp // fold

    # ---- Batch-tile selection: big tiles, ragged last tile allowed. -----------------------
    if tb is None:
        tb = 4096                       # sweep 2048-8192; bias >=4096 on v7x (faster HBM)
    tb = min(tb, rows)
    if tb < rows:
        tb = max(8, (tb // 8) * 8)      # sublane multiple; last tile may be ragged (writes masked)
    grid = (pl.cdiv(rows, tb),)

    row_spec = pl.BlockSpec((tb, Df), lambda i: (i, 0))     # streamed per grid step
    w_spec = pl.BlockSpec((Df, Df), lambda i: (0, 0))       # VMEM-resident across the grid
    vec_spec = pl.BlockSpec((1, Df), lambda i: (0, 0))      # VMEM-resident across the grid

    # ---- VMEM budget + generation-aware cap. ----------------------------------------------
    x_bytes = jnp.dtype(x.dtype).itemsize
    w_bytes = jnp.dtype(w_dtype).itemsize
    vmem_need = (
        2 * 2 * tb * Df * x_bytes       # x and out tiles, double-buffered
        + 2 * 2 * Df * Df * w_bytes     # w1, w2 (default pipeline buffer pair each)
        + 2 * Df * Df * 4               # averaging matrix M (f32)
        + 4 * 2 * Df * 4                # biases + LN params
        + 8 * tb * Df * 4               # f32 intermediates headroom
    )
    try:
        vmem_cap = int(pltpu.get_tpu_info().vmem_capacity_bytes)
    except Exception:
        vmem_cap = 64 << 20             # conservative fallback (v7x per-TC size)
    vmem_limit = int(min(max(2 * vmem_need, 4 << 20), (vmem_cap * 3) // 4))

    cost = pl.CostEstimate(
        flops=int(2 * rows * Df * Df * 4 + 12 * rows * Df),   # w1, mean, var, w2 matmuls + VPU ops
        transcendentals=int(rows * Df),                        # rsqrt lanes
        bytes_accessed=int(2 * rows * Df * x_bytes + 2 * Df * Df * w_bytes
                           + Df * Df * 4 + 4 * Df * 4),
    )

    out = pl.pallas_call(
        shared_encoder_kernel,
        out_shape=jax.ShapeDtypeStruct((rows, Df), x.dtype),
        grid=grid,
        in_specs=[
            row_spec,   # x (lane-folded)
            w_spec,     # w1 (block-diag)
            vec_spec,   # b1
            vec_spec,   # gamma
            vec_spec,   # beta
            w_spec,     # w2 (block-diag)
            vec_spec,   # b2
            w_spec,     # M (group-averaging matrix)
        ],
        out_specs=row_spec,
        compiler_params=pltpu.CompilerParams(
            dimension_semantics=("parallel",),
            vmem_limit_bytes=vmem_limit,
        ),
        cost_estimate=cost,
    )(x_in, w1f, b1f, gf, betaf, w2f, b2f, mmat)

    if fold > 1:
        out = out.reshape(Bp, D)[:B]
    return out


def reference(x, w1, b1, gamma, beta, w2, b2):
    """Pure-JAX reference of the PyTorch forward."""
    h = x @ w1 + b1
    h = jnp.where(h > 0, h, 0.01 * h)
    mean = jnp.mean(h, axis=-1, keepdims=True)
    var = jnp.mean((h - mean) ** 2, axis=-1, keepdims=True)
    hn = (h - mean) / jnp.sqrt(var + 1e-5) * gamma + beta
    y = hn @ w2 + b2
    return jnp.where(y > 0, y, 0.01 * y)


if __name__ == "__main__":
    # opt.embd_size_a = 32. B=78 exercises the fold padding (78 -> 80 rows -> 20 folded rows)
    # and, with tb=8, a 3-step grid whose last tile is ragged (masked stores).
    B, D = 78, 32

    key = jax.random.PRNGKey(0)
    kx, kw1, kb1, kw2, kb2 = jax.random.split(key, 5)

    x = jax.random.normal(kx, (B, D), dtype=jnp.float32)

    # Deterministic parameter init (PyTorch-like uniform bounds), stored as (in, out).
    bound = 1.0 / jnp.sqrt(D)
    w1 = jax.random.uniform(kw1, (D, D), jnp.float32, -bound, bound)
    b1 = jax.random.uniform(kb1, (1, D), jnp.float32, -bound, bound)
    w2 = jax.random.uniform(kw2, (D, D), jnp.float32, -bound, bound)
    b2 = jax.random.uniform(kb2, (1, D), jnp.float32, -bound, bound)
    gamma = jnp.ones((1, D), jnp.float32)   # LayerNorm weight init
    beta = jnp.zeros((1, D), jnp.float32)   # LayerNorm bias init

    out = shared_encoder(x, w1, b1, gamma, beta, w2, b2, tb=8)
    out = jax.block_until_ready(out)

    ref = reference(x, w1, b1, gamma, beta, w2, b2)
    assert out.shape == (B, D)
    assert jnp.allclose(out, ref, atol=5e-5, rtol=1e-5), "mismatch vs reference"

    print("KERNEL_OK")
</pallas_src>

<mosaic_0001>
module attributes {stable_mosaic.version = 11 : i64} {
  func.func @shared_encoder_kernel(%arg0: i32, %arg1: memref<8x128xf32, #tpu.memory_space<vmem>>, %arg2: memref<128x128xf32, #tpu.memory_space<vmem>>, %arg3: memref<1x128xf32, #tpu.memory_space<vmem>>, %arg4: memref<1x128xf32, #tpu.memory_space<vmem>>, %arg5: memref<1x128xf32, #tpu.memory_space<vmem>>, %arg6: memref<128x128xf32, #tpu.memory_space<vmem>>, %arg7: memref<1x128xf32, #tpu.memory_space<vmem>>, %arg8: memref<128x128xf32, #tpu.memory_space<vmem>>, %arg9: memref<8x128xf32, #tpu.memory_space<vmem>>) attributes {dimension_semantics = [#tpu.dimension_semantics<parallel>], iteration_bounds = array<i64: 3>, scalar_prefetch = 0 : i64, scratch_operands = 0 : i64, tpu.core_type = #tpu.core_type<tc>, window_params = [{transform_indices = @transform_0, window_bounds = array<i64: 8, 128>}, {pipeline_mode = #tpu.pipeline_mode<synchronous>, transform_indices = @transform_1, window_bounds = array<i64: 128, 128>}, {pipeline_mode = #tpu.pipeline_mode<synchronous>, transform_indices = @transform_2, window_bounds = array<i64: 1, 128>}, {pipeline_mode = #tpu.pipeline_mode<synchronous>, transform_indices = @transform_3, window_bounds = array<i64: 1, 128>}, {pipeline_mode = #tpu.pipeline_mode<synchronous>, transform_indices = @transform_4, window_bounds = array<i64: 1, 128>}, {pipeline_mode = #tpu.pipeline_mode<synchronous>, transform_indices = @transform_5, window_bounds = array<i64: 128, 128>}, {pipeline_mode = #tpu.pipeline_mode<synchronous>, transform_indices = @transform_6, window_bounds = array<i64: 1, 128>}, {pipeline_mode = #tpu.pipeline_mode<synchronous>, transform_indices = @transform_7, window_bounds = array<i64: 128, 128>}, {transform_indices = @transform_8, window_bounds = array<i64: 8, 128>}]} {
    %c0 = arith.constant 0 : index
    %c0_0 = arith.constant 0 : index
    %0 = vector.load %arg1[%c0, %c0_0] : memref<8x128xf32, #tpu.memory_space<vmem>>, vector<8x128xf32>
    %c0_1 = arith.constant 0 : index
    %c0_2 = arith.constant 0 : index
    %1 = vector.load %arg2[%c0_1, %c0_2] : memref<128x128xf32, #tpu.memory_space<vmem>>, vector<128x128xf32>
    %cst = arith.constant dense<0.000000e+00> : vector<8x128xf32>
    %2 = tpu.matmul %0, %1, %cst {dimension_numbers = #tpu.dot_dimension_numbers<[1], [0], [0], [1], [0, 0, 1, 1], [], []>} : vector<8x128xf32>, vector<128x128xf32>, vector<8x128xf32> -> vector<8x128xf32>
    %c0_3 = arith.constant 0 : index
    %c0_4 = arith.constant 0 : index
    %3 = vector.load %arg3[%c0_3, %c0_4] : memref<1x128xf32, #tpu.memory_space<vmem>>, vector<1x128xf32>
    %4 = vector.broadcast %3 : vector<1x128xf32> to vector<8x128xf32>
    %5 = arith.addf %2, %4 : vector<8x128xf32>
    %cst_5 = arith.constant 0.00999999977 : f32
    %6 = vector.broadcast %cst_5 : f32 to vector<8x128xf32>
    %7 = arith.mulf %6, %5 : vector<8x128xf32>
    %8 = arith.maximumf %5, %7 : vector<8x128xf32>
    %c0_6 = arith.constant 0 : index
    %c0_7 = arith.constant 0 : index
    %9 = vector.load %arg8[%c0_6, %c0_7] : memref<128x128xf32, #tpu.memory_space<vmem>>, vector<128x128xf32>
    %cst_8 = arith.constant dense<0.000000e+00> : vector<8x128xf32>
    %10 = tpu.matmul %8, %9, %cst_8 {dimension_numbers = #tpu.dot_dimension_numbers<[1], [0], [0], [1], [0, 0, 1, 1], [], []>} : vector<8x128xf32>, vector<128x128xf32>, vector<8x128xf32> -> vector<8x128xf32>
    %11 = arith.subf %8, %10 : vector<8x128xf32>
    %12 = arith.mulf %11, %11 : vector<8x128xf32>
    %c0_9 = arith.constant 0 : index
    %c0_10 = arith.constant 0 : index
    %13 = vector.load %arg8[%c0_9, %c0_10] : memref<128x128xf32, #tpu.memory_space<vmem>>, vector<128x128xf32>
    %cst_11 = arith.constant dense<0.000000e+00> : vector<8x128xf32>
    %14 = tpu.matmul %12, %13, %cst_11 {dimension_numbers = #tpu.dot_dimension_numbers<[1], [0], [0], [1], [0, 0, 1, 1], [], []>} : vector<8x128xf32>, vector<128x128xf32>, vector<8x128xf32> -> vector<8x128xf32>
    %cst_12 = arith.constant 9.99999974E-6 : f32
    %15 = vector.broadcast %cst_12 : f32 to vector<8x128xf32>
    %16 = arith.addf %14, %15 : vector<8x128xf32>
    %17 = math.rsqrt %16 : vector<8x128xf32>
    %18 = arith.mulf %11, %17 : vector<8x128xf32>
    %c0_13 = arith.constant 0 : index
    %c0_14 = arith.constant 0 : index
    %19 = vector.load %arg4[%c0_13, %c0_14] : memref<1x128xf32, #tpu.memory_space<vmem>>, vector<1x128xf32>
    %20 = vector.broadcast %19 : vector<1x128xf32> to vector<8x128xf32>
    %21 = arith.mulf %18, %20 : vector<8x128xf32>
    %c0_15 = arith.constant 0 : index
    %c0_16 = arith.constant 0 : index
    %22 = vector.load %arg5[%c0_15, %c0_16] : memref<1x128xf32, #tpu.memory_space<vmem>>, vector<1x128xf32>
    %23 = vector.broadcast %22 : vector<1x128xf32> to vector<8x128xf32>
    %24 = arith.addf %21, %23 : vector<8x128xf32>
    %c0_17 = arith.constant 0 : index
    %c0_18 = arith.constant 0 : index
    %25 = vector.load %arg6[%c0_17, %c0_18] : memref<128x128xf32, #tpu.memory_space<vmem>>, vector<128x128xf32>
    %cst_19 = arith.constant dense<0.000000e+00> : vector<8x128xf32>
    %26 = tpu.matmul %24, %25, %cst_19 {dimension_numbers = #tpu.dot_dimension_numbers<[1], [0], [0], [1], [0, 0, 1, 1], [], []>} : vector<8x128xf32>, vector<128x128xf32>, vector<8x128xf32> -> vector<8x128xf32>
    %c0_20 = arith.constant 0 : index
    %c0_21 = arith.constant 0 : index
    %27 = vector.load %arg7[%c0_20, %c0_21] : memref<1x128xf32, #tpu.memory_space<vmem>>, vector<1x128xf32>
    %28 = vector.broadcast %27 : vector<1x128xf32> to vector<8x128xf32>
    %29 = arith.addf %26, %28 : vector<8x128xf32>
    %cst_22 = arith.constant 0.00999999977 : f32
    %30 = vector.broadcast %cst_22 : f32 to vector<8x128xf32>
    %31 = arith.mulf %30, %29 : vector<8x128xf32>
    %32 = arith.maximumf %29, %31 : vector<8x128xf32>
    %c0_23 = arith.constant 0 : index
    %c0_24 = arith.constant 0 : index
    %33 = vector.load %arg9[%c0_23, %c0_24] : memref<8x128xf32, #tpu.memory_space<vmem>>, vector<8x128xf32>
    tpu.vector_store %arg9[%c0_23, %c0_24], %32 {strides = array<i32>} : memref<8x128xf32, #tpu.memory_space<vmem>>, vector<8x128xf32>,
    return
  }
  func.func @transform_0(%arg0: i32) -> (i32, i32) {
    %c0_i32 = arith.constant 0 : i32
    %c0_i32_0 = arith.constant 0 : i32
    return %arg0, %c0_i32 : i32, i32
  }
  func.func @transform_1(%arg0: i32) -> (i32, i32) {
    %c0_i32 = arith.constant 0 : i32
    %c0_i32_0 = arith.constant 0 : i32
    %c0_i32_1 = arith.constant 0 : i32
    return %c0_i32, %c0_i32_0 : i32, i32
  }
  func.func @transform_2(%arg0: i32) -> (i32, i32) {
    %c0_i32 = arith.constant 0 : i32
    %c0_i32_0 = arith.constant 0 : i32
    %c0_i32_1 = arith.constant 0 : i32
    return %c0_i32, %c0_i32_0 : i32, i32
  }
  func.func @transform_3(%arg0: i32) -> (i32, i32) {
    %c0_i32 = arith.constant 0 : i32
    %c0_i32_0 = arith.constant 0 : i32
    %c0_i32_1 = arith.constant 0 : i32
    return %c0_i32, %c0_i32_0 : i32, i32
  }
  func.func @transform_4(%arg0: i32) -> (i32, i32) {
    %c0_i32 = arith.constant 0 : i32
    %c0_i32_0 = arith.constant 0 : i32
    %c0_i32_1 = arith.constant 0 : i32
    return %c0_i32, %c0_i32_0 : i32, i32
  }
  func.func @transform_5(%arg0: i32) -> (i32, i32) {
    %c0_i32 = arith.constant 0 : i32
    %c0_i32_0 = arith.constant 0 : i32
    %c0_i32_1 = arith.constant 0 : i32
    return %c0_i32, %c0_i32_0 : i32, i32
  }
  func.func @transform_6(%arg0: i32) -> (i32, i32) {
    %c0_i32 = arith.constant 0 : i32
    %c0_i32_0 = arith.constant 0 : i32
    %c0_i32_1 = arith.constant 0 : i32
    return %c0_i32, %c0_i32_0 : i32, i32
  }
  func.func @transform_7(%arg0: i32) -> (i32, i32) {
    %c0_i32 = arith.constant 0 : i32
    %c0_i32_0 = arith.constant 0 : i32
    %c0_i32_1 = arith.constant 0 : i32
    return %c0_i32, %c0_i32_0 : i32, i32
  }
  func.func @transform_8(%arg0: i32) -> (i32, i32) {
    %c0_i32 = arith.constant 0 : i32
    %c0_i32_0 = arith.constant 0 : i32
    return %arg0, %c0_i32 : i32, i32
  }
}

</mosaic_0001>

<llo_original>
// kernel: tpu_custom_call.1
$region0: #{tpu_custom_call.1}
  #allocation0 [shape = 'u32[]', space=smem, size = 0x4, offset = 0x4, fixed_abs, tag = 'smem constant byte address 0x4 - core index']
  #allocation1 [shape = 'u32[144,128]{1,0:T(1,128)}', space=vmem, size = 0x12000, scoped, tag = 'internal scratch']
  %s0 = inlined_call_operand.hbm [shape: f32[20,128], index: 0, kind: input, shape index: {}]
  %s1 = inlined_call_operand.hbm [shape: f32[128,128], index: 1, kind: input, shape index: {}]
  %s2 = inlined_call_operand.vmem [shape: f32[1,128], index: 2, kind: input, shape index: {}]
  %s3 = inlined_call_operand.vmem [shape: f32[1,128], index: 3, kind: input, shape index: {}]
  %s4 = inlined_call_operand.vmem [shape: f32[1,128], index: 4, kind: input, shape index: {}]
  %s5 = inlined_call_operand.hbm [shape: f32[128,128], index: 5, kind: input, shape index: {}]
  %s6 = inlined_call_operand.vmem [shape: f32[1,128], index: 6, kind: input, shape index: {}]
  %s7 = inlined_call_operand.hbm [shape: f32[128,128], index: 7, kind: input, shape index: {}]
  %s8 = inlined_call_operand.hbm [shape: f32[20,128], index: 8, kind: output, shape index: {}]
  %s9 = sld [smem:[#allocation0]]
  $region81: #{tpu_custom_call.1} parent=0
    _
  %s11 = ssub.s32 1, %s9
  %s12 = scalar_select 0, %s11, %s9
  $region1: #{tpu_custom_call.1} parent=0
    #allocation2 [shape = 'u8[8192]{0}', space=vmem, size = 0x2000, scoped, tag = 'input window, operand 0']
    #allocation3 [shape = 's32[2]{0}', space=sflag, size = 0x8, scoped, tag = 'scoped memory for tpu_custom_call.1']
    #allocation4 [shape = 's32[2]{0}', space=sflag, size = 0x8, scoped, tag = 'scoped memory for tpu_custom_call.1']
    #allocation5 [shape = 'u8[65536]{0}', space=vmem, size = 0x10000, scoped, tag = 'input window, operand 1, single buffered']
    #allocation6 [shape = 's32[1]{0}', space=sflag, size = 0x4, scoped, tag = 'scoped memory for tpu_custom_call.1']
    #allocation7 [shape = 'u8[65536]{0}', space=vmem, size = 0x10000, scoped, tag = 'input window, operand 5, single buffered']
    #allocation8 [shape = 'u8[65536]{0}', space=vmem, size = 0x10000, scoped, tag = 'input window, operand 7, single buffered']
    #allocation9 [shape = 's32[1]{0}', space=sflag, size = 0x4, scoped, tag = 'scoped memory for tpu_custom_call.1']
    #allocation10 [shape = 'u8[8192]{0}', space=vmem, size = 0x2000, scoped, tag = 'output window, operand 0']
    %13 = vsyncpa [#allocation3], 0
    %s14 = scalar_lea.sflag [#allocation3], 1
    %15 = vsyncpa %s14, 0
    %16 = vsyncpa [#allocation6], 0
    %17 = vsyncpa [#allocation9], 0
    %18 = vsyncpa [#allocation4], 0
    %s19 = scalar_lea.sflag [#allocation4], 1
    %20 = vsyncpa %s19, 0
    loop: start=0, step=1, limit=5
    $region2: #{tpu_custom_call.1} parent=1 // loop_pre_header
      _
    $region3: #{tpu_custom_call.1} parent=1 // loop_header
      %s22 = sphi 0, %s26
      %p23 = scmp.ge.s32.totalorder %s22, 5
      %s32 = sphi 0, %s34
      %s35 = sphi 0, %s32
      %s36 = sphi 0, %s35
      %s52 = sphi 0, %s36
      %s56 = sphi 0, %s56
      %s58 = sphi 0, %s56
      %s59 = sphi 0, %s58
      %s73 = sphi 0, %s59
      %s77 = sphi 0, %s77
      %s79 = sphi 0, %s77
      %s80 = sphi 0, %s79
      %s94 = sphi 0, %s80
      %s98 = sphi 0, %s98
      %s100 = sphi 0, %s98
      %s101 = sphi 0, %s100
      %s115 = sphi 0, %s101
      %s119 = sphi 0, %s119
      %s121 = sphi 0, %s119
      %s122 = sphi 0, %s121
      %s136 = sphi 0, %s122
      %s140 = sphi 0, %s140
      %s142 = sphi 0, %s140
      %s143 = sphi 0, %s142
      %s157 = sphi 0, %s143
      %s161 = sphi 0, %s161
      %s163 = sphi 0, %s161
      %s164 = sphi 0, %s163
      %s178 = sphi 0, %s164
      %s182 = sphi 0, %s182
      %s184 = sphi 0, %s182
      %s185 = sphi 0, %s184
      %s199 = sphi 0, %s185
      %s205 = sphi 0, %s207
      %s208 = sphi 0, %s205
      %s209 = sphi 0, %s208
      %s225 = sphi 0, %s209
    $region4: #{tpu_custom_call.1} parent=1 // loop_header_branch
      %25 = sbr.rel (%p23) target = $region8
    $region5: #{tpu_custom_call.1} parent=1 // loop_body
      %s27 = ssub.s32 %s22, 1
      %s28 = ssub.s32 %s22, 2
      %s29 = sadd.s32 %s22, 1
      %s30 = ssub.s32 %s22, %s29
      %p31 = scmp.eq.s32.totalorder %s30, 0
      %s33 = sadd.s32 %s32, 1
      %s34 = scalar_select %p31, %s32, %s33
      %p37 = pneg %p31
      %p38 = scmp.eq.s32.totalorder %s22, 2
      %p39 = por %p37, %p38
      %p40 = scmp.ne.s32.totalorder %s32, %s35
      %p41 = scmp.eq.s32.totalorder %s22, 0
      %p42 = por %p40, %p41
      %p43 = scmp.ne.s32.totalorder %s32, %s35
      %p44 = scmp.eq.s32.totalorder %s27, 2
      %p45 = por %p43, %p44
      %p46 = scmp.ne.s32.totalorder %s35, %s36
      %p47 = scmp.eq.s32.totalorder %s27, 0
      %p48 = por %p46, %p47
      %p49 = scmp.ne.s32.totalorder %s35, %s36
      %p50 = scmp.eq.s32.totalorder %s28, 2
      %p51 = por %p49, %p50
      %p53 = scmp.ne.s32.totalorder %s36, %s52
      %p54 = scmp.eq.s32.totalorder %s28, 0
      %p55 = por %p53, %p54
      %s57 = sadd.s32 %s56, 1
      %p60 = scmp.eq.s32.totalorder %s22, 2
      %p61 = scmp.ne.s32.totalorder %s56, %s58
      %p62 = scmp.eq.s32.totalorder %s22, 0
      %p63 = por %p61, %p62
      %p64 = scmp.ne.s32.totalorder %s56, %s58
      %p65 = scmp.eq.s32.totalorder %s27, 2
      %p66 = por %p64, %p65
      %p67 = scmp.ne.s32.totalorder %s58, %s59
      %p68 = scmp.eq.s32.totalorder %s27, 0
      %p69 = por %p67, %p68
      %p70 = scmp.ne.s32.totalorder %s58, %s59
      %p71 = scmp.eq.s32.totalorder %s28, 2
      %p72 = por %p70, %p71
      %p74 = scmp.ne.s32.totalorder %s59, %s73
      %p75 = scmp.eq.s32.totalorder %s28, 0
      %p76 = por %p74, %p75
      %s78 = sadd.s32 %s77, 1
      %p81 = scmp.eq.s32.totalorder %s22, 2
      %p82 = scmp.ne.s32.totalorder %s77, %s79
      %p83 = scmp.eq.s32.totalorder %s22, 0
      %p84 = por %p82, %p83
      %p85 = scmp.ne.s32.totalorder %s77, %s79
      %p86 = scmp.eq.s32.totalorder %s27, 2
      %p87 = por %p85, %p86
      %p88 = scmp.ne.s32.totalorder %s79, %s80
      %p89 = scmp.eq.s32.totalorder %s27, 0
      %p90 = por %p88, %p89
      %p91 = scmp.ne.s32.totalorder %s79, %s80
      %p92 = scmp.eq.s32.totalorder %s28, 2
      %p93 = por %p91, %p92
      %p95 = scmp.ne.s32.totalorder %s80, %s94
      %p96 = scmp.eq.s32.totalorder %s28, 0
      %p97 = por %p95, %p96
      %s99 = sadd.s32 %s98, 1
      %p102 = scmp.eq.s32.totalorder %s22, 2
      %p103 = scmp.ne.s32.totalorder %s98, %s100
      %p104 = scmp.eq.s32.totalorder %s22, 0
      %p105 = por %p103, %p104
      %p106 = scmp.ne.s32.totalorder %s98, %s100
      %p107 = scmp.eq.s32.totalorder %s27, 2
      %p108 = por %p106, %p107
      %p109 = scmp.ne.s32.totalorder %s100, %s101
      %p110 = scmp.eq.s32.totalorder %s27, 0
      %p111 = por %p109, %p110
      %p112 = scmp.ne.s32.totalorder %s100, %s101
      %p113 = scmp.eq.s32.totalorder %s28, 2
      %p114 = por %p112, %p113
      %p116 = scmp.ne.s32.totalorder %s101, %s115
      %p117 = scmp.eq.s32.totalorder %s28, 0
      %p118 = por %p116, %p117
      %s120 = sadd.s32 %s119, 1
      %p123 = scmp.eq.s32.totalorder %s22, 2
      %p124 = scmp.ne.s32.totalorder %s119, %s121
      %p125 = scmp.eq.s32.totalorder %s22, 0
      %p126 = por %p124, %p125
      %p127 = scmp.ne.s32.totalorder %s119, %s121
      %p128 = scmp.eq.s32.totalorder %s27, 2
      %p129 = por %p127, %p128
      %p130 = scmp.ne.s32.totalorder %s121, %s122
      %p131 = scmp.eq.s32.totalorder %s27, 0
      %p132 = por %p130, %p131
      %p133 = scmp.ne.s32.totalorder %s121, %s122
      %p134 = scmp.eq.s32.totalorder %s28, 2
      %p135 = por %p133, %p134
      %p137 = scmp.ne.s32.totalorder %s122, %s136
      %p138 = scmp.eq.s32.totalorder %s28, 0
      %p139 = por %p137, %p138
      %s141 = sadd.s32 %s140, 1
      %p144 = scmp.eq.s32.totalorder %s22, 2
      %p145 = scmp.ne.s32.totalorder %s140, %s142
      %p146 = scmp.eq.s32.totalorder %s22, 0
      %p147 = por %p145, %p146
      %p148 = scmp.ne.s32.totalorder %s140, %s142
      %p149 = scmp.eq.s32.totalorder %s27, 2
      %p150 = por %p148, %p149
      %p151 = scmp.ne.s32.totalorder %s142, %s143
      %p152 = scmp.eq.s32.totalorder %s27, 0
      %p153 = por %p151, %p152
      %p154 = scmp.ne.s32.totalorder %s142, %s143
      %p155 = scmp.eq.s32.totalorder %s28, 2
      %p156 = por %p154, %p155
      %p158 = scmp.ne.s32.totalorder %s143, %s157
      %p159 = scmp.eq.s32.totalorder %s28, 0
      %p160 = por %p158, %p159
      %s162 = sadd.s32 %s161, 1
      %p165 = scmp.eq.s32.totalorder %s22, 2
      %p166 = scmp.ne.s32.totalorder %s161, %s163
      %p167 = scmp.eq.s32.totalorder %s22, 0
      %p168 = por %p166, %p167
      %p169 = scmp.ne.s32.totalorder %s161, %s163
      %p170 = scmp.eq.s32.totalorder %s27, 2
      %p171 = por %p169, %p170
      %p172 = scmp.ne.s32.totalorder %s163, %s164
      %p173 = scmp.eq.s32.totalorder %s27, 0
      %p174 = por %p172, %p173
      %p175 = scmp.ne.s32.totalorder %s163, %s164
      %p176 = scmp.eq.s32.totalorder %s28, 2
      %p177 = por %p175, %p176
      %p179 = scmp.ne.s32.totalorder %s164, %s178
      %p180 = scmp.eq.s32.totalorder %s28, 0
      %p181 = por %p179, %p180
      %s183 = sadd.s32 %s182, 1
      %p186 = scmp.eq.s32.totalorder %s22, 2
      %p187 = scmp.ne.s32.totalorder %s182, %s184
      %p188 = scmp.eq.s32.totalorder %s22, 0
      %p189 = por %p187, %p188
      %p190 = scmp.ne.s32.totalorder %s182, %s184
      %p191 = scmp.eq.s32.totalorder %s27, 2
      %p192 = por %p190, %p191
      %p193 = scmp.ne.s32.totalorder %s184, %s185
      %p194 = scmp.eq.s32.totalorder %s27, 0
      %p195 = por %p193, %p194
      %p196 = scmp.ne.s32.totalorder %s184, %s185
      %p197 = scmp.eq.s32.totalorder %s28, 2
      %p198 = por %p196, %p197
      %p200 = scmp.ne.s32.totalorder %s185, %s199
      %p201 = scmp.eq.s32.totalorder %s28, 0
      %p202 = por %p200, %p201
      %s203 = ssub.s32 %s22, %s29
      %p204 = scmp.eq.s32.totalorder %s203, 0
      %s206 = sadd.s32 %s205, 1
      %s207 = scalar_select %p204, %s205, %s206
      %p210 = pneg %p204
      %p211 = scmp.eq.s32.totalorder %s22, 2
      %p212 = por %p210, %p211
      %p213 = scmp.ne.s32.totalorder %s205, %s208
      %p214 = scmp.eq.s32.totalorder %s22, 0
      %p215 = por %p213, %p214
      %p216 = scmp.ne.s32.totalorder %s205, %s208
      %p217 = scmp.eq.s32.totalorder %s27, 2
      %p218 = por %p216, %p217
      %p219 = scmp.ne.s32.totalorder %s208, %s209
      %p220 = scmp.eq.s32.totalorder %s27, 0
      %p221 = por %p219, %p220
      %p222 = scmp.ne.s32.totalorder %s208, %s209
      %p223 = scmp.eq.s32.totalorder %s28, 2
      %p224 = por %p222, %p223
      %p226 = scmp.ne.s32.totalorder %s209, %s225
      %p227 = scmp.eq.s32.totalorder %s28, 0
      %p228 = por %p226, %p227
      %p229 = scmp.le.s32.totalorder 1, %s22
      %p230 = scmp.lt.s32.totalorder %s22, 4
      %p231 = pnand %p229, %p230
      %p232 = pneg %p231
      // Predicated region
      $region9: #{tpu_custom_call.1} parent=5 // pred_check
        _
      $region10: #{tpu_custom_call.1} parent=5 // pred_check_branch
        %234 = sbr.rel (%p231) target = $region12
      $region11: #{tpu_custom_call.1} parent=5 // pred_region
        %s235 = ssub.s32 %s22, 1
        // Predicated region
        $region13: #{tpu_custom_call.1} parent=11 // pred_check
          %p236 = pneg %p69
        $region14: #{tpu_custom_call.1} parent=11 // pred_check_branch
          %238 = sbr.rel (%p236) target = $region16
        $region15: #{tpu_custom_call.1} parent=11 // pred_region
          %s240 = ssub.s32 2048, 2048
          %241 = vsyncadd [#allocation6], %s240
          %s242 = sshll.u32 [#allocation5], 4
          %s243 = int_to_ptr.vmem [resolvable:$true] %s242
          %248 = dma.hbm_to_vmem [thread:$0]  %s1, 2048, %s243, [#allocation6], 128, 128, 8
        $region16: #{tpu_custom_call.1} parent=11 // pred_fallthru
          _
        // Predicated region
        $region17: #{tpu_custom_call.1} parent=11 // pred_check
          %p249 = pneg %p90
        $region18: #{tpu_custom_call.1} parent=11 // pred_check_branch
          %251 = sbr.rel (%p249) target = $region20
        $region19: #{tpu_custom_call.1} parent=11 // pred_region
          _
        $region20: #{tpu_custom_call.1} parent=11 // pred_fallthru
          _
        // Predicated region
        $region21: #{tpu_custom_call.1} parent=11 // pred_check
          %p252 = pneg %p111
        $region22: #{tpu_custom_call.1} parent=11 // pred_check_branch
          %254 = sbr.rel (%p252) target = $region24
        $region23: #{tpu_custom_call.1} parent=11 // pred_region
          _
        $region24: #{tpu_custom_call.1} parent=11 // pred_fallthru
          _
        // Predicated region
        $region25: #{tpu_custom_call.1} parent=11 // pred_check
          %p255 = pneg %p132
        $region26: #{tpu_custom_call.1} parent=11 // pred_check_branch
          %257 = sbr.rel (%p255) target = $region28
        $region27: #{tpu_custom_call.1} parent=11 // pred_region
          _
        $region28: #{tpu_custom_call.1} parent=11 // pred_fallthru
          _
        // Predicated region
        $region29: #{tpu_custom_call.1} parent=11 // pred_check
          %p258 = pneg %p153
        $region30: #{tpu_custom_call.1} parent=11 // pred_check_branch
          %260 = sbr.rel (%p258) target = $region32
        $region31: #{tpu_custom_call.1} parent=11 // pred_region
          %s262 = ssub.s32 2048, 2048
          %263 = vsyncadd [#allocation6], %s262
          %s264 = sshll.u32 [#allocation7], 4
          %s265 = int_to_ptr.vmem [resolvable:$true] %s264
          %270 = dma.hbm_to_vmem [thread:$0]  %s5, 2048, %s265, [#allocation6], 128, 128, 8
        $region32: #{tpu_custom_call.1} parent=11 // pred_fallthru
          _
        // Predicated region
        $region33: #{tpu_custom_call.1} parent=11 // pred_check
          %p271 = pneg %p174
        $region34: #{tpu_custom_call.1} parent=11 // pred_check_branch
          %273 = sbr.rel (%p271) target = $region36
        $region35: #{tpu_custom_call.1} parent=11 // pred_region
          _
        $region36: #{tpu_custom_call.1} parent=11 // pred_fallthru
          _
        // Predicated region
        $region37: #{tpu_custom_call.1} parent=11 // pred_check
          %p274 = pneg %p195
        $region38: #{tpu_custom_call.1} parent=11 // pred_check_branch
          %276 = sbr.rel (%p274) target = $region40
        $region39: #{tpu_custom_call.1} parent=11 // pred_region
          %s278 = ssub.s32 2048, 2048
          %279 = vsyncadd [#allocation9], %s278
          %s280 = sshll.u32 [#allocation8], 4
          %s281 = int_to_ptr.vmem [resolvable:$true] %s280
          %286 = dma.hbm_to_vmem [thread:$0]  %s7, 2048, %s281, [#allocation9], 128, 128, 8
        $region40: #{tpu_custom_call.1} parent=11 // pred_fallthru
          _
      $region12: #{tpu_custom_call.1} parent=5 // pred_fallthru
        _
      %p287 = scmp.lt.s32.totalorder %s22, 3
      // Predicated region
      $region41: #{tpu_custom_call.1} parent=5 // pred_check
        %p288 = pneg %p287
      $region42: #{tpu_custom_call.1} parent=5 // pred_check_branch
        %290 = sbr.rel (%p288) target = $region44
      $region43: #{tpu_custom_call.1} parent=5 // pred_region
        // Predicated region
        $region45: #{tpu_custom_call.1} parent=43 // pred_check
          %p291 = pneg %p42
        $region46: #{tpu_custom_call.1} parent=43 // pred_check_branch
          %293 = sbr.rel (%p291) target = $region48
        $region47: #{tpu_custom_call.1} parent=43 // pred_region
          %s294 = sand.u32 %s32, 1
          %s295 = scalar_lea.sflag [#allocation3], %s294
          %s296 = sand.u32 %s32, 1
          %s297 = smul.addr %s296, 8
          %s298 = scalar_lea.vmem [#allocation2], %s297
          %s300 = ssub.s32 128, 128
          %301 = vsyncadd %s295, %s300
          %s302 = smul.addr %s22, 128
          %s303 = scalar_lea.hbm %s0, %s302
          %s305 = sshll.u32 %s298, 4
          %s306 = int_to_ptr.vmem [resolvable:$true] %s305
          %308 = dma.hbm_to_vmem [thread:$0]  %s303, 128, %s306, %s295
        $region48: #{tpu_custom_call.1} parent=43 // pred_fallthru
          _
      $region44: #{tpu_custom_call.1} parent=5 // pred_fallthru
        _
      %p309 = scmp.le.s32.totalorder 1, %s22
      %p310 = scmp.lt.s32.totalorder %s22, 4
      %p311 = pnand %p309, %p310
      %p312 = pneg %p311
      // Predicated region
      $region49: #{tpu_custom_call.1} parent=5 // pred_check
        _
      $region50: #{tpu_custom_call.1} parent=5 // pred_check_branch
        %314 = sbr.rel (%p311) target = $region52
      $region51: #{tpu_custom_call.1} parent=5 // pred_region
        %s315 = ssub.s32 %s22, 1
        %s316 = sand.u32 %s35, 1
        %s317 = scalar_lea.sflag [#allocation3], %s316
        %s318 = sand.u32 %s35, 1
        %s319 = smul.addr %s318, 8
        %s320 = scalar_lea.vmem [#allocation2], %s319
        // Predicated region
        $region53: #{tpu_custom_call.1} parent=51 // pred_check
          %p321 = pneg %p48
        $region54: #{tpu_custom_call.1} parent=51 // pred_check_branch
          %323 = sbr.rel (%p321) target = $region56
        $region55: #{tpu_custom_call.1} parent=51 // pred_region
          %324 = dma.done %s317, 128
        $region56: #{tpu_custom_call.1} parent=51 // pred_fallthru
          _
        // Predicated region
        $region57: #{tpu_custom_call.1} parent=51 // pred_check
          %p325 = pneg %p69
        $region58: #{tpu_custom_call.1} parent=51 // pred_check_branch
          %327 = sbr.rel (%p325) target = $region60
        $region59: #{tpu_custom_call.1} parent=51 // pred_region
          %328 = dma.done [#allocation6], 2048
        $region60: #{tpu_custom_call.1} parent=51 // pred_fallthru
          _
        // Predicated region
        $region61: #{tpu_custom_call.1} parent=51 // pred_check
          %p329 = pneg %p153
        $region62: #{tpu_custom_call.1} parent=51 // pred_check_branch
          %331 = sbr.rel (%p329) target = $region64
        $region63: #{tpu_custom_call.1} parent=51 // pred_region
          %332 = dma.done [#allocation6], 2048
        $region64: #{tpu_custom_call.1} parent=51 // pred_fallthru
          _
        // Predicated region
        $region65: #{tpu_custom_call.1} parent=51 // pred_check
          %p333 = pneg %p195
        $region66: #{tpu_custom_call.1} parent=51 // pred_check_branch
          %335 = sbr.rel (%p333) target = $region68
        $region67: #{tpu_custom_call.1} parent=51 // pred_region
          %336 = dma.done [#allocation9], 2048
        $region68: #{tpu_custom_call.1} parent=51 // pred_fallthru
          _
        %s337 = sand.u32 %s35, 1
        %s338 = scalar_lea.sflag [#allocation3], %s337
        %s339 = sand.u32 %s35, 1
        %s340 = smul.addr %s339, 8
        %s341 = scalar_lea.vmem [#allocation2], %s340
        %p342 = pneg %p48
        %p343 = pneg %p45
        %p344 = pneg %p69
        %p345 = pneg %p66
        %p346 = pneg %p90
        %p347 = pneg %p87
        %p348 = pneg %p111
        %p349 = pneg %p108
        %p350 = pneg %p132
        %p351 = pneg %p129
        %p352 = pneg %p153
        %p353 = pneg %p150
        %p354 = pneg %p174
        %p355 = pneg %p171
        %p356 = pneg %p195
        %p357 = pneg %p192
        %p358 = pneg %p221
        %p359 = pneg %p218
        %s360 = sand.u32 %s208, 1
        %s361 = scalar_lea.sflag [#allocation4], %s360
        %s362 = sand.u32 %s208, 1
        %s363 = smul.addr %s362, 8
        %s364 = scalar_lea.vmem [#allocation10], %s363
        %v365 = vld [vmem:[%s320] sm:$0xff]
        %v366 = vld [vmem:[#allocation5] sm:$0xff]
        %v367 = vld [vmem:[#allocation5 + $0x8] sm:$0xff]
        %v368 = vld [vmem:[#allocation5 + $0x10] sm:$0xff]
        %v369 = vld [vmem:[#allocation5 + $0x18] sm:$0xff]
        %v370 = vld [vmem:[#allocation5 + $0x20] sm:$0xff]
        %v371 = vld [vmem:[#allocation5 + $0x28] sm:$0xff]
        %v372 = vld [vmem:[#allocation5 + $0x30] sm:$0xff]
        %v373 = vld [vmem:[#allocation5 + $0x38] sm:$0xff]
        %v374 = vld [vmem:[#allocation5 + $0x40] sm:$0xff]
        %v375 = vld [vmem:[#allocation5 + $0x48] sm:$0xff]
        %v376 = vld [vmem:[#allocation5 + $0x50] sm:$0xff]
        %v377 = vld [vmem:[#allocation5 + $0x58] sm:$0xff]
        %v378 = vld [vmem:[#allocation5 + $0x60] sm:$0xff]
        %v379 = vld [vmem:[#allocation5 + $0x68] sm:$0xff]
        %v380 = vld [vmem:[#allocation5 + $0x70] sm:$0xff]
        %v381 = vld [vmem:[#allocation5 + $0x78] sm:$0xff]
        %v382 = vld [vmem:[%s2] sm:$0x1]
        %v384 = vlaneseq
        %v385 = vshrl.u32 %v384, 7
        %v386 = vsub.s32 0, %v385
        %v387 = vrot.slane %v382, %v386
        %389 = vmatprep.subr.mxu0 0.0
        %390 = vmatpush1.msra.mxu0 %v366
        %391 = vmatprep.subr.mxu0 0.0
        %392 = vmatpush1.msra.mxu0 %v367
        %393 = vmatprep.subr.mxu0 0.0
        %394 = vmatpush1.msra.mxu0 %v368
        %395 = vmatprep.subr.mxu0 0.0
        %396 = vmatpush1.msra.mxu0 %v369
        %397 = vmatprep.subr.mxu0 0.0
        %398 = vmatpush1.msra.mxu0 %v370
        %399 = vmatprep.subr.mxu0 0.0
        %400 = vmatpush1.msra.mxu0 %v371
        %401 = vmatprep.subr.mxu0 0.0
        %402 = vmatpush1.msra.mxu0 %v372
        %403 = vmatprep.subr.mxu0 0.0
        %404 = vmatpush1.msra.mxu0 %v373
        %405 = vmatprep.subr.mxu0 0.0
        %406 = vmatpush1.msra.mxu0 %v374
        %407 = vmatprep.subr.mxu0 0.0
        %408 = vmatpush1.msra.mxu0 %v375
        %409 = vmatprep.subr.mxu0 0.0
        %410 = vmatpush1.msra.mxu0 %v376
        %411 = vmatprep.subr.mxu0 0.0
        %412 = vmatpush1.msra.mxu0 %v377
        %413 = vmatprep.subr.mxu0 0.0
        %414 = vmatpush1.msra.mxu0 %v378
        %415 = vmatprep.subr.mxu0 0.0
        %416 = vmatpush1.msra.mxu0 %v379
        %417 = vmatprep.subr.mxu0 0.0
        %418 = vmatpush1.msra.mxu0 %v380
        %419 = vmatprep.subr.mxu0 0.0
        %420 = vmatpush1.msra.mxu0 %v381
        %421 = vmatprep.subr.mxu0 0.0
        %422 = vmatpush1.msra.mxu0 0.0
        %423 = vmatprep.subr.mxu0 0.0
        %424 = vmatpush1.msra.mxu0 0.0
        %425 = vmatprep.subr.mxu0 0.0
        %426 = vmatpush1.msra.mxu0 0.0
        %427 = vmatprep.subr.mxu0 0.0
        %428 = vmatpush1.msra.mxu0 0.0
        %429 = vmatprep.subr.mxu0 0.0
        %430 = vmatpush1.msra.mxu0 0.0
        %431 = vmatprep.subr.mxu0 0.0
        %432 = vmatpush1.msra.mxu0 0.0
        %433 = vmatprep.subr.mxu0 0.0
        %434 = vmatpush1.msra.mxu0 0.0
        %435 = vmatprep.subr.mxu0 0.0
        %436 = vmatpush1.msra.mxu0 0.0
        %437 = vmatprep.subr.mxu0 0.0
        %438 = vmatpush1.msra.mxu0 0.0
        %439 = vmatprep.subr.mxu0 0.0
        %440 = vmatpush1.msra.mxu0 0.0
        %441 = vmatprep.subr.mxu0 0.0
        %442 = vmatpush1.msra.mxu0 0.0
        %443 = vmatprep.subr.mxu0 0.0
        %444 = vmatpush1.msra.mxu0 0.0
        %445 = vmatprep.subr.mxu0 0.0
        %446 = vmatpush1.msra.mxu0 0.0
        %447 = vmatprep.subr.mxu0 0.0
        %448 = vmatpush1.msra.mxu0 0.0
        %449 = vmatprep.subr.mxu0 0.0
        %450 = vmatpush1.msra.mxu0 0.0
        %451 = vmatprep.subr.mxu0 0.0
        %452 = vmatpush1.msra.mxu0 0.0
        %453 = vmatprep.mubr.f32.mxu0 0.0
        %454 = vmatmul.mubr.f32.gmra.mrb[0].mxu0 %v365
        %v455 = vpop.f32.mrb[0].mxu0
        %v456 = vadd.f32 %v387, %v455
        %v457 = vpop.f32.mrb[0].mxu0
        %458 = vdwg.mxu0
        %v459 = vmul.f32 %v456, 0.01
        %v460 = vmax.f32 %v456, %v459
        %v461 = vld [vmem:[#allocation8] sm:$0xff]
        %v462 = vld [vmem:[#allocation8 + $0x8] sm:$0xff]
        %v463 = vld [vmem:[#allocation8 + $0x10] sm:$0xff]
        %v464 = vld [vmem:[#allocation8 + $0x18] sm:$0xff]
        %v465 = vld [vmem:[#allocation8 + $0x20] sm:$0xff]
        %v466 = vld [vmem:[#allocation8 + $0x28] sm:$0xff]
        %v467 = vld [vmem:[#allocation8 + $0x30] sm:$0xff]
        %v468 = vld [vmem:[#allocation8 + $0x38] sm:$0xff]
        %v469 = vld [vmem:[#allocation8 + $0x40] sm:$0xff]
        %v470 = vld [vmem:[#allocation8 + $0x48] sm:$0xff]
        %v471 = vld [vmem:[#allocation8 + $0x50] sm:$0xff]
        %v472 = vld [vmem:[#allocation8 + $0x58] sm:$0xff]
        %v473 = vld [vmem:[#allocation8 + $0x60] sm:$0xff]
        %v474 = vld [vmem:[#allocation8 + $0x68] sm:$0xff]
        %v475 = vld [vmem:[#allocation8 + $0x70] sm:$0xff]
        %v476 = vld [vmem:[#allocation8 + $0x78] sm:$0xff]
        %477 = vmatprep.subr.mxu0 0.0
        %478 = vmatpush1.msra.mxu0 %v461
        %479 = vmatprep.subr.mxu0 0.0
        %480 = vmatpush1.msra.mxu0 %v462
        %481 = vmatprep.subr.mxu0 0.0
        %482 = vmatpush1.msra.mxu0 %v463
        %483 = vmatprep.subr.mxu0 0.0
        %484 = vmatpush1.msra.mxu0 %v464
        %485 = vmatprep.subr.mxu0 0.0
        %486 = vmatpush1.msra.mxu0 %v465
        %487 = vmatprep.subr.mxu0 0.0
        %488 = vmatpush1.msra.mxu0 %v466
        %489 = vmatprep.subr.mxu0 0.0
        %490 = vmatpush1.msra.mxu0 %v467
        %491 = vmatprep.subr.mxu0 0.0
        %492 = vmatpush1.msra.mxu0 %v468
        %493 = vmatprep.subr.mxu0 0.0
        %494 = vmatpush1.msra.mxu0 %v469
        %495 = vmatprep.subr.mxu0 0.0
        %496 = vmatpush1.msra.mxu0 %v470
        %497 = vmatprep.subr.mxu0 0.0
        %498 = vmatpush1.msra.mxu0 %v471
        %499 = vmatprep.subr.mxu0 0.0
        %500 = vmatpush1.msra.mxu0 %v472
        %501 = vmatprep.subr.mxu0 0.0
        %502 = vmatpush1.msra.mxu0 %v473
        %503 = vmatprep.subr.mxu0 0.0
        %504 = vmatpush1.msra.mxu0 %v474
        %505 = vmatprep.subr.mxu0 0.0
        %506 = vmatpush1.msra.mxu0 %v475
        %507 = vmatprep.subr.mxu0 0.0
        %508 = vmatpush1.msra.mxu0 %v476
        %509 = vmatprep.subr.mxu0 0.0
        %510 = vmatpush1.msra.mxu0 0.0
        %511 = vmatprep.subr.mxu0 0.0
        %512 = vmatpush1.msra.mxu0 0.0
        %513 = vmatprep.subr.mxu0 0.0
        %514 = vmatpush1.msra.mxu0 0.0
        %515 = vmatprep.subr.mxu0 0.0
        %516 = vmatpush1.msra.mxu0 0.0
        %517 = vmatprep.subr.mxu0 0.0
        %518 = vmatpush1.msra.mxu0 0.0
        %519 = vmatprep.subr.mxu0 0.0
        %520 = vmatpush1.msra.mxu0 0.0
        %521 = vmatprep.subr.mxu0 0.0
        %522 = vmatpush1.msra.mxu0 0.0
        %523 = vmatprep.subr.mxu0 0.0
        %524 = vmatpush1.msra.mxu0 0.0
        %525 = vmatprep.subr.mxu0 0.0
        %526 = vmatpush1.msra.mxu0 0.0
        %527 = vmatprep.subr.mxu0 0.0
        %528 = vmatpush1.msra.mxu0 0.0
        %529 = vmatprep.subr.mxu0 0.0
        %530 = vmatpush1.msra.mxu0 0.0
        %531 = vmatprep.subr.mxu0 0.0
        %532 = vmatpush1.msra.mxu0 0.0
        %533 = vmatprep.subr.mxu0 0.0
        %534 = vmatpush1.msra.mxu0 0.0
        %535 = vmatprep.subr.mxu0 0.0
        %536 = vmatpush1.msra.mxu0 0.0
        %537 = vmatprep.subr.mxu0 0.0
        %538 = vmatpush1.msra.mxu0 0.0
        %539 = vmatprep.subr.mxu0 0.0
        %540 = vmatpush1.msra.mxu0 0.0
        %541 = vmatprep.mubr.f32.mxu0 0.0
        %542 = vmatmul.mubr.f32.gmra.mrb[0].mxu0 %v460
        %v543 = vpop.f32.mrb[0].mxu0
        %v544 = vadd.f32 0.0, %v543
        %v545 = vpop.f32.mrb[0].mxu0
        %546 = vdwg.mxu0
        %v547 = vsub.f32 %v460, %v544
        %v548 = vmul.f32 %v547, %v547
        %549 = vmatprep.subr.mxu0 0.0
        %550 = vmatpush1.msra.mxu0 %v461
        %551 = vmatprep.subr.mxu0 0.0
        %552 = vmatpush1.msra.mxu0 %v462
        %553 = vmatprep.subr.mxu0 0.0
        %554 = vmatpush1.msra.mxu0 %v463
        %555 = vmatprep.subr.mxu0 0.0
        %556 = vmatpush1.msra.mxu0 %v464
        %557 = vmatprep.subr.mxu0 0.0
        %558 = vmatpush1.msra.mxu0 %v465
        %559 = vmatprep.subr.mxu0 0.0
        %560 = vmatpush1.msra.mxu0 %v466
        %561 = vmatprep.subr.mxu0 0.0
        %562 = vmatpush1.msra.mxu0 %v467
        %563 = vmatprep.subr.mxu0 0.0
        %564 = vmatpush1.msra.mxu0 %v468
        %565 = vmatprep.subr.mxu0 0.0
        %566 = vmatpush1.msra.mxu0 %v469
        %567 = vmatprep.subr.mxu0 0.0
        %568 = vmatpush1.msra.mxu0 %v470
        %569 = vmatprep.subr.mxu0 0.0
        %570 = vmatpush1.msra.mxu0 %v471
        %571 = vmatprep.subr.mxu0 0.0
        %572 = vmatpush1.msra.mxu0 %v472
        %573 = vmatprep.subr.mxu0 0.0
        %574 = vmatpush1.msra.mxu0 %v473
        %575 = vmatprep.subr.mxu0 0.0
        %576 = vmatpush1.msra.mxu0 %v474
        %577 = vmatprep.subr.mxu0 0.0
        %578 = vmatpush1.msra.mxu0 %v475
        %579 = vmatprep.subr.mxu0 0.0
        %580 = vmatpush1.msra.mxu0 %v476
        %581 = vmatprep.subr.mxu0 0.0
        %582 = vmatpush1.msra.mxu0 0.0
        %583 = vmatprep.subr.mxu0 0.0
        %584 = vmatpush1.msra.mxu0 0.0
        %585 = vmatprep.subr.mxu0 0.0
        %586 = vmatpush1.msra.mxu0 0.0
        %587 = vmatprep.subr.mxu0 0.0
        %588 = vmatpush1.msra.mxu0 0.0
        %589 = vmatprep.subr.mxu0 0.0
        %590 = vmatpush1.msra.mxu0 0.0
        %591 = vmatprep.subr.mxu0 0.0
        %592 = vmatpush1.msra.mxu0 0.0
        %593 = vmatprep.subr.mxu0 0.0
        %594 = vmatpush1.msra.mxu0 0.0
        %595 = vmatprep.subr.mxu0 0.0
        %596 = vmatpush1.msra.mxu0 0.0
        %597 = vmatprep.subr.mxu0 0.0
        %598 = vmatpush1.msra.mxu0 0.0
        %599 = vmatprep.subr.mxu0 0.0
        %600 = vmatpush1.msra.mxu0 0.0
        %601 = vmatprep.subr.mxu0 0.0
        %602 = vmatpush1.msra.mxu0 0.0
        %603 = vmatprep.subr.mxu0 0.0
        %604 = vmatpush1.msra.mxu0 0.0
        %605 = vmatprep.subr.mxu0 0.0
        %606 = vmatpush1.msra.mxu0 0.0
        %607 = vmatprep.subr.mxu0 0.0
        %608 = vmatpush1.msra.mxu0 0.0
        %609 = vmatprep.subr.mxu0 0.0
        %610 = vmatpush1.msra.mxu0 0.0
        %611 = vmatprep.subr.mxu0 0.0
        %612 = vmatpush1.msra.mxu0 0.0
        %613 = vmatprep.mubr.f32.mxu0 0.0
        %614 = vmatmul.mubr.f32.gmra.mrb[0].mxu0 %v548
        %v615 = vpop.f32.mrb[0].mxu0
        %v616 = vadd.f32 1e-05, %v615
        %v617 = vpop.f32.mrb[0].mxu0
        %618 = vdwg.mxu0
        %v619 = vrsqrt.pop %v616
        %v620 = vmul.f32 %v547, %v619
        %v621 = vld [vmem:[%s3] sm:$0x1]
        %v623 = vlaneseq
        %v624 = vshrl.u32 %v623, 7
        %v625 = vsub.s32 0, %v624
        %v626 = vrot.slane %v621, %v625
        %v628 = vmul.f32 %v620, %v626
        %v629 = vld [vmem:[%s4] sm:$0x1]
        %v631 = vlaneseq
        %v632 = vshrl.u32 %v631, 7
        %v633 = vsub.s32 0, %v632
        %v634 = vrot.slane %v629, %v633
        %v636 = vadd.f32 %v628, %v634
        %v637 = vld [vmem:[#allocation7] sm:$0xff]
        %v638 = vld [vmem:[#allocation7 + $0x8] sm:$0xff]
        %v639 = vld [vmem:[#allocation7 + $0x10] sm:$0xff]
        %v640 = vld [vmem:[#allocation7 + $0x18] sm:$0xff]
        %v641 = vld [vmem:[#allocation7 + $0x20] sm:$0xff]
        %v642 = vld [vmem:[#allocation7 + $0x28] sm:$0xff]
        %v643 = vld [vmem:[#allocation7 + $0x30] sm:$0xff]
        %v644 = vld [vmem:[#allocation7 + $0x38] sm:$0xff]
        %v645 = vld [vmem:[#allocation7 + $0x40] sm:$0xff]
        %v646 = vld [vmem:[#allocation7 + $0x48] sm:$0xff]
        %v647 = vld [vmem:[#allocation7 + $0x50] sm:$0xff]
        %v648 = vld [vmem:[#allocation7 + $0x58] sm:$0xff]
        %v649 = vld [vmem:[#allocation7 + $0x60] sm:$0xff]
        %v650 = vld [vmem:[#allocation7 + $0x68] sm:$0xff]
        %v651 = vld [vmem:[#allocation7 + $0x70] sm:$0xff]
        %v652 = vld [vmem:[#allocation7 + $0x78] sm:$0xff]
        %v653 = vld [vmem:[%s6] sm:$0x1]
        %v655 = vlaneseq
        %v656 = vshrl.u32 %v655, 7
        %v657 = vsub.s32 0, %v656
        %v658 = vrot.slane %v653, %v657
        %660 = vmatprep.subr.mxu0 0.0
        %661 = vmatpush1.msra.mxu0 %v637
        %662 = vmatprep.subr.mxu0 0.0
        %663 = vmatpush1.msra.mxu0 %v638
        %664 = vmatprep.subr.mxu0 0.0
        %665 = vmatpush1.msra.mxu0 %v639
        %666 = vmatprep.subr.mxu0 0.0
        %667 = vmatpush1.msra.mxu0 %v640
        %668 = vmatprep.subr.mxu0 0.0
        %669 = vmatpush1.msra.mxu0 %v641
        %670 = vmatprep.subr.mxu0 0.0
        %671 = vmatpush1.msra.mxu0 %v642
        %672 = vmatprep.subr.mxu0 0.0
        %673 = vmatpush1.msra.mxu0 %v643
        %674 = vmatprep.subr.mxu0 0.0
        %675 = vmatpush1.msra.mxu0 %v644
        %676 = vmatprep.subr.mxu0 0.0
        %677 = vmatpush1.msra.mxu0 %v645
        %678 = vmatprep.subr.mxu0 0.0
        %679 = vmatpush1.msra.mxu0 %v646
        %680 = vmatprep.subr.mxu0 0.0
        %681 = vmatpush1.msra.mxu0 %v647
        %682 = vmatprep.subr.mxu0 0.0
        %683 = vmatpush1.msra.mxu0 %v648
        %684 = vmatprep.subr.mxu0 0.0
        %685 = vmatpush1.msra.mxu0 %v649
        %686 = vmatprep.subr.mxu0 0.0
        %687 = vmatpush1.msra.mxu0 %v650
        %688 = vmatprep.subr.mxu0 0.0
        %689 = vmatpush1.msra.mxu0 %v651
        %690 = vmatprep.subr.mxu0 0.0
        %691 = vmatpush1.msra.mxu0 %v652
        %692 = vmatprep.subr.mxu0 0.0
        %693 = vmatpush1.msra.mxu0 0.0
        %694 = vmatprep.subr.mxu0 0.0
        %695 = vmatpush1.msra.mxu0 0.0
        %696 = vmatprep.subr.mxu0 0.0
        %697 = vmatpush1.msra.mxu0 0.0
        %698 = vmatprep.subr.mxu0 0.0
        %699 = vmatpush1.msra.mxu0 0.0
        %700 = vmatprep.subr.mxu0 0.0
        %701 = vmatpush1.msra.mxu0 0.0
        %702 = vmatprep.subr.mxu0 0.0
        %703 = vmatpush1.msra.mxu0 0.0
        %704 = vmatprep.subr.mxu0 0.0
        %705 = vmatpush1.msra.mxu0 0.0
        %706 = vmatprep.subr.mxu0 0.0
        %707 = vmatpush1.msra.mxu0 0.0
        %708 = vmatprep.subr.mxu0 0.0
        %709 = vmatpush1.msra.mxu0 0.0
        %710 = vmatprep.subr.mxu0 0.0
        %711 = vmatpush1.msra.mxu0 0.0
        %712 = vmatprep.subr.mxu0 0.0
        %713 = vmatpush1.msra.mxu0 0.0
        %714 = vmatprep.subr.mxu0 0.0
        %715 = vmatpush1.msra.mxu0 0.0
        %716 = vmatprep.subr.mxu0 0.0
        %717 = vmatpush1.msra.mxu0 0.0
        %718 = vmatprep.subr.mxu0 0.0
        %719 = vmatpush1.msra.mxu0 0.0
        %720 = vmatprep.subr.mxu0 0.0
        %721 = vmatpush1.msra.mxu0 0.0
        %722 = vmatprep.subr.mxu0 0.0
        %723 = vmatpush1.msra.mxu0 0.0
        %724 = vmatprep.mubr.f32.mxu0 0.0
        %725 = vmatmul.mubr.f32.gmra.mrb[0].mxu0 %v636
        %v726 = vpop.f32.mrb[0].mxu0
        %v727 = vadd.f32 %v658, %v726
        %v728 = vpop.f32.mrb[0].mxu0
        %729 = vdwg.mxu0
        %v730 = vmul.f32 %v727, 0.01
        %v731 = vmax.f32 %v727, %v730
        %732 = vst [vmem:[%s364] sm:$0xff] %v731
        %s733 = sand.u32 %s208, 1
        %s734 = scalar_lea.sflag [#allocation4], %s733
        %s735 = sand.u32 %s208, 1
        %s736 = smul.addr %s735, 8
        %s737 = scalar_lea.vmem [#allocation10], %s736
        // Predicated region
        $region69: #{tpu_custom_call.1} parent=51 // pred_check
          %p738 = pneg %p218
        $region70: #{tpu_custom_call.1} parent=51 // pred_check_branch
          %740 = sbr.rel (%p738) target = $region72
        $region71: #{tpu_custom_call.1} parent=51 // pred_region
          %s742 = ssub.s32 128, 128
          %743 = vsyncadd %s734, %s742
          %s744 = smul.addr %s27, 128
          %s745 = scalar_lea.hbm %s8, %s744
          %s747 = sshll.u32 %s737, 4
          %s748 = int_to_ptr.vmem [resolvable:$true] %s747
          %750 = dma.vmem_to_hbm [thread:$0]  %s748, 128, %s745, %s734
        $region72: #{tpu_custom_call.1} parent=51 // pred_fallthru
          _
      $region52: #{tpu_custom_call.1} parent=5 // pred_fallthru
        _
      %p751 = scmp.le.s32.totalorder 2, %s22
      // Predicated region
      $region73: #{tpu_custom_call.1} parent=5 // pred_check
        %p752 = pneg %p751
      $region74: #{tpu_custom_call.1} parent=5 // pred_check_branch
        %754 = sbr.rel (%p752) target = $region76
      $region75: #{tpu_custom_call.1} parent=5 // pred_region
        %s755 = ssub.s32 %s22, 2
        // Predicated region
        $region77: #{tpu_custom_call.1} parent=75 // pred_check
          %p756 = pneg %p224
        $region78: #{tpu_custom_call.1} parent=75 // pred_check_branch
          %758 = sbr.rel (%p756) target = $region80
        $region79: #{tpu_custom_call.1} parent=75 // pred_region
          %s759 = sand.u32 %s209, 1
          %s760 = scalar_lea.sflag [#allocation4], %s759
          %s761 = sand.u32 %s209, 1
          %s762 = smul.addr %s761, 8
          %s763 = scalar_lea.vmem [#allocation10], %s762
          %764 = dma.done %s760, 128
        $region80: #{tpu_custom_call.1} parent=75 // pred_fallthru
          _
      $region76: #{tpu_custom_call.1} parent=5 // pred_fallthru
        _
    $region6: #{tpu_custom_call.1} parent=1 // loop_footer
      %s26 = sadd.s32 1, %s22
    $region7: #{tpu_custom_call.1} parent=1 // loop_footer_branch
      %21 = sbr.rel target = $region3
    $region8: #{tpu_custom_call.1} parent=1 // loop_exit
      _
    %765 = vsyncpa [#allocation3], 1
    %s766 = scalar_lea.sflag [#allocation3], 1
    %767 = vsyncpa %s766, 1
    %768 = vsyncpa [#allocation6], 1
    %769 = vsyncpa [#allocation9], 1
    %770 = vsyncpa [#allocation4], 1
    %s771 = scalar_lea.sflag [#allocation4], 1
    %772 = vsyncpa %s771, 1

</llo_original>
